<compile_context>
chip_gen: v5e
topology: v5e:2x2
jax: 0.10.0
libtpu: 0.0.40
codegen_flags: <defaults>
</compile_context>

<pallas_src>
import jax
import jax.numpy as jnp
from jax.experimental import pallas as pl
from jax.experimental.pallas import tpu as pltpu


def mlp_kernel(x_ref, w1_ref, b1_ref, w2_ref, b2_ref, w3_ref, b3_ref, o_ref):
    # x_ref: (TM, 1) f32, w1/b1: (1, 64) f32, w2: (64, 64), b2: (1, 64) f32,
    # w3: (64, 2), b3: (1, 2) f32, o_ref: (TM, 2) f32.
    cdt = w2_ref.dtype  # hidden compute dtype: f32 (default) or bf16 (v6e/v7x option)
    x = x_ref[...]  # (TM, 1)

    # Layer 1: K=1 contraction -> rank-1 broadcast multiply on the VPU (no degenerate MXU op).
    z1 = x * w1_ref[...] + b1_ref[...]          # (TM, 64) f32, exact
    h1 = jnp.tanh(z1.astype(cdt))               # (TM, 64)

    # Layer 2: the only real matmul; MXU with f32 accumulation.
    z2 = jnp.dot(h1, w2_ref[...], preferred_element_type=jnp.float32) + b2_ref[...]
    h2 = jnp.tanh(z2.astype(cdt))               # (TM, 64)

    # Layer 3: 2-wide head written directly (masked 2-lane stores are not the bottleneck).
    o_ref[...] = (
        jnp.dot(h2, w3_ref[...], preferred_element_type=jnp.float32) + b3_ref[...]
    ).astype(o_ref.dtype)


def _round_up(a, m):
    return ((a + m - 1) // m) * m


def _num_tensorcores():
    """Best-effort TensorCore count (megacore-aware tiling). Falls back to 1."""
    try:
        info = pltpu.get_tpu_info()
        for name in ("num_cores", "core_count", "num_tensorcores", "tensor_core_count"):
            v = getattr(info, name, None)
            if isinstance(v, int) and v >= 1:
                return v
    except Exception:
        pass
    try:
        v = getattr(jax.devices()[0], "num_cores", None)
        if isinstance(v, int) and v >= 1:
            return v
    except Exception:
        pass
    return 1


def mlp_forward(x, w1, b1, w2, b2, w3, b3, *, tm=2048, hidden_dtype=jnp.float32):
    """x: (N, 1) float32. Weights stored (in, out); biases broadcastable to (1, out).

    hidden_dtype=jnp.bfloat16 is an optional v6e/v7x speed lever (tanh/MXU in bf16,
    f32 accumulation); keep float32 on v5e or when 1e-5 accuracy is required.
    """
    x = jnp.asarray(x, jnp.float32)
    N = x.shape[0]
    H1 = w1.shape[1]
    H2 = w2.shape[1]
    OUT = w3.shape[1]

    w1r = jnp.asarray(w1, jnp.float32)
    b1r = jnp.asarray(b1, jnp.float32).reshape(1, H1)
    b2r = jnp.asarray(b2, jnp.float32).reshape(1, H2)
    b3r = jnp.asarray(b3, jnp.float32).reshape(1, OUT)
    # Hidden-path weights in the compute dtype (f32 by default).
    w2c = jnp.asarray(w2, hidden_dtype)
    w3c = jnp.asarray(w3, hidden_dtype)

    # Sanitize the tile: multiple of 256 (hence of 8 sublanes), at least 256.
    tm = max(256, (int(tm) // 256) * 256)
    # Never bigger than the (8-rounded) batch.
    tm_eff = min(tm, _round_up(N, 8))
    # Megacore (v7x): keep enough grid steps for all TensorCores; skip on 1-TC parts.
    cores = _num_tensorcores()
    if cores > 1 and N >= cores * 512:
        tm_eff = min(tm_eff, _round_up(pl.cdiv(N, cores), 256))

    grid = (pl.cdiv(N, tm_eff),)  # ragged last block handled by Pallas masking
    full = lambda shape: pl.BlockSpec(shape, lambda i: (0, 0))

    out = pl.pallas_call(
        mlp_kernel,
        out_shape=jax.ShapeDtypeStruct((N, OUT), jnp.float32),
        grid_spec=pltpu.PrefetchScalarGridSpec(
            num_scalar_prefetch=0,
            grid=grid,
            in_specs=[
                pl.BlockSpec((tm_eff, 1), lambda i: (i, 0)),  # x tile
                full((1, H1)),    # w1  (resident in VMEM across the grid)
                full((1, H1)),    # b1
                full((H1, H2)),   # w2
                full((1, H2)),    # b2
                full((H2, OUT)),  # w3
                full((1, OUT)),   # b3
            ],
            out_specs=pl.BlockSpec((tm_eff, OUT), lambda i: (i, 0)),
        ),
        compiler_params=pltpu.CompilerParams(
            dimension_semantics=("parallel",)
        ),
    )(x, w1r, b1r, w2c, b2r, w3c, b3r)

    return out


def init_params(key):
    # Deterministic synthetic init matching the PyTorch module's shapes:
    #   linear1: Linear(1, 64)   -> W1 (64,1),  b1 (64,)
    #   linear2: Linear(64, 64)  -> W2 (64,64), b2 (64,)
    #   linear3: Linear(64, 2)   -> W3 (2,64),  b3 (2,)
    # Stored transposed (in, out) so the kernel computes x @ W + b, which equals
    # PyTorch's x @ W_pt^T + b.
    k1, k2, k3, k4, k5, k6 = jax.random.split(key, 6)
    scale = 0.1
    w1 = scale * jax.random.normal(k1, (1, 64), jnp.float32)
    b1 = scale * jax.random.normal(k2, (1, 64), jnp.float32)
    w2 = scale * jax.random.normal(k3, (64, 64), jnp.float32)
    b2 = scale * jax.random.normal(k4, (1, 64), jnp.float32)
    w3 = scale * jax.random.normal(k5, (64, 2), jnp.float32)
    b3 = scale * jax.random.normal(k6, (1, 2), jnp.float32)
    return w1, b1, w2, b2, w3, b3


def reference_forward(x, w1, b1, w2, b2, w3, b3):
    h1 = jnp.tanh(x @ w1 + b1.reshape(1, -1))
    h2 = jnp.tanh(h1 @ w2 + b2.reshape(1, -1))
    return h2 @ w3 + b3.reshape(1, -1)


if __name__ == "__main__":
    key = jax.random.PRNGKey(0)
    kx1, kx2, kp = jax.random.split(key, 3)
    params = init_params(kp)

    # Small batch: single small tile (sublane-only tile, exercises the tiny-N path).
    N_small = 16
    x_small = jax.random.normal(kx1, (N_small, 1), jnp.float32)
    out_small = jax.block_until_ready(mlp_forward(x_small, *params))
    ref_small = reference_forward(x_small, *params)
    assert out_small.shape == (N_small, 2)
    assert jnp.allclose(out_small, ref_small, atol=1e-5, rtol=1e-5), "mismatch (small)"

    # Larger batch with an explicit small tile: multi-step grid + ragged last block
    # (N not a multiple of the tile, no wrapper-side padding).
    N_big = 1000
    x_big = jax.random.normal(kx2, (N_big, 1), jnp.float32)
    out_big = jax.block_until_ready(mlp_forward(x_big, *params, tm=512))
    ref_big = reference_forward(x_big, *params)
    assert out_big.shape == (N_big, 2)
    assert jnp.allclose(out_big, ref_big, atol=1e-5, rtol=1e-5), "mismatch (big, tm=512)"

    # Default large-tile path on the same data.
    out_def = jax.block_until_ready(mlp_forward(x_big, *params))
    assert out_def.shape == (N_big, 2)
    assert jnp.allclose(out_def, ref_big, atol=1e-5, rtol=1e-5), "mismatch (big, default tm)"

    print("KERNEL_OK")
</pallas_src>

<mosaic_0001>
module attributes {stable_mosaic.version = 11 : i64} {
  func.func @mlp_kernel(%arg0: i32, %arg1: memref<16x1xf32, #tpu.memory_space<vmem>>, %arg2: memref<1x64xf32, #tpu.memory_space<vmem>>, %arg3: memref<1x64xf32, #tpu.memory_space<vmem>>, %arg4: memref<64x64xf32, #tpu.memory_space<vmem>>, %arg5: memref<1x64xf32, #tpu.memory_space<vmem>>, %arg6: memref<64x2xf32, #tpu.memory_space<vmem>>, %arg7: memref<1x2xf32, #tpu.memory_space<vmem>>, %arg8: memref<16x2xf32, #tpu.memory_space<vmem>>) attributes {dimension_semantics = [#tpu.dimension_semantics<parallel>], iteration_bounds = array<i64: 1>, scalar_prefetch = 0 : i64, scratch_operands = 0 : i64, tpu.core_type = #tpu.core_type<tc>, window_params = [{transform_indices = @transform_0, window_bounds = array<i64: 16, 1>}, {pipeline_mode = #tpu.pipeline_mode<synchronous>, transform_indices = @transform_1, window_bounds = array<i64: 1, 64>}, {pipeline_mode = #tpu.pipeline_mode<synchronous>, transform_indices = @transform_2, window_bounds = array<i64: 1, 64>}, {pipeline_mode = #tpu.pipeline_mode<synchronous>, transform_indices = @transform_3, window_bounds = array<i64: 64, 64>}, {pipeline_mode = #tpu.pipeline_mode<synchronous>, transform_indices = @transform_4, window_bounds = array<i64: 1, 64>}, {pipeline_mode = #tpu.pipeline_mode<synchronous>, transform_indices = @transform_5, window_bounds = array<i64: 64, 2>}, {pipeline_mode = #tpu.pipeline_mode<synchronous>, transform_indices = @transform_6, window_bounds = array<i64: 1, 2>}, {transform_indices = @transform_7, window_bounds = array<i64: 16, 2>}]} {
    %c0 = arith.constant 0 : index
    %c0_0 = arith.constant 0 : index
    %0 = vector.load %arg1[%c0, %c0_0] : memref<16x1xf32, #tpu.memory_space<vmem>>, vector<16x1xf32>
    %c0_1 = arith.constant 0 : index
    %c0_2 = arith.constant 0 : index
    %1 = vector.load %arg2[%c0_1, %c0_2] : memref<1x64xf32, #tpu.memory_space<vmem>>, vector<1x64xf32>
    %2 = vector.broadcast %0 : vector<16x1xf32> to vector<16x64xf32>
    %3 = vector.broadcast %1 : vector<1x64xf32> to vector<16x64xf32>
    %4 = arith.mulf %2, %3 : vector<16x64xf32>
    %c0_3 = arith.constant 0 : index
    %c0_4 = arith.constant 0 : index
    %5 = vector.load %arg3[%c0_3, %c0_4] : memref<1x64xf32, #tpu.memory_space<vmem>>, vector<1x64xf32>
    %6 = vector.broadcast %5 : vector<1x64xf32> to vector<16x64xf32>
    %7 = arith.addf %4, %6 : vector<16x64xf32>
    %8 = math.tanh %7 : vector<16x64xf32>
    %c0_5 = arith.constant 0 : index
    %c0_6 = arith.constant 0 : index
    %9 = vector.load %arg4[%c0_5, %c0_6] : memref<64x64xf32, #tpu.memory_space<vmem>>, vector<64x64xf32>
    %cst = arith.constant dense<0.000000e+00> : vector<16x64xf32>
    %10 = tpu.matmul %8, %9, %cst {dimension_numbers = #tpu.dot_dimension_numbers<[1], [0], [0], [1], [0, 0, 1, 1], [], []>} : vector<16x64xf32>, vector<64x64xf32>, vector<16x64xf32> -> vector<16x64xf32>
    %c0_7 = arith.constant 0 : index
    %c0_8 = arith.constant 0 : index
    %11 = vector.load %arg5[%c0_7, %c0_8] : memref<1x64xf32, #tpu.memory_space<vmem>>, vector<1x64xf32>
    %12 = vector.broadcast %11 : vector<1x64xf32> to vector<16x64xf32>
    %13 = arith.addf %10, %12 : vector<16x64xf32>
    %14 = math.tanh %13 : vector<16x64xf32>
    %c0_9 = arith.constant 0 : index
    %c0_10 = arith.constant 0 : index
    %15 = vector.load %arg6[%c0_9, %c0_10] : memref<64x2xf32, #tpu.memory_space<vmem>>, vector<64x2xf32>
    %cst_11 = arith.constant dense<0.000000e+00> : vector<16x2xf32>
    %16 = tpu.matmul %14, %15, %cst_11 {dimension_numbers = #tpu.dot_dimension_numbers<[1], [0], [0], [1], [0, 0, 1, 1], [], []>} : vector<16x64xf32>, vector<64x2xf32>, vector<16x2xf32> -> vector<16x2xf32>
    %c0_12 = arith.constant 0 : index
    %c0_13 = arith.constant 0 : index
    %17 = vector.load %arg7[%c0_12, %c0_13] : memref<1x2xf32, #tpu.memory_space<vmem>>, vector<1x2xf32>
    %18 = vector.broadcast %17 : vector<1x2xf32> to vector<16x2xf32>
    %19 = arith.addf %16, %18 : vector<16x2xf32>
    %c0_14 = arith.constant 0 : index
    %c0_15 = arith.constant 0 : index
    %20 = vector.load %arg8[%c0_14, %c0_15] : memref<16x2xf32, #tpu.memory_space<vmem>>, vector<16x2xf32>
    tpu.vector_store %arg8[%c0_14, %c0_15], %19 {strides = array<i32>} : memref<16x2xf32, #tpu.memory_space<vmem>>, vector<16x2xf32>,
    return
  }
  func.func @transform_0(%arg0: i32) -> (i32, i32) {
    %c0_i32 = arith.constant 0 : i32
    %c0_i32_0 = arith.constant 0 : i32
    return %arg0, %c0_i32 : i32, i32
  }
  func.func @transform_1(%arg0: i32) -> (i32, i32) {
    %c0_i32 = arith.constant 0 : i32
    %c0_i32_0 = arith.constant 0 : i32
    %c0_i32_1 = arith.constant 0 : i32
    return %c0_i32, %c0_i32_0 : i32, i32
  }
  func.func @transform_2(%arg0: i32) -> (i32, i32) {
    %c0_i32 = arith.constant 0 : i32
    %c0_i32_0 = arith.constant 0 : i32
    %c0_i32_1 = arith.constant 0 : i32
    return %c0_i32, %c0_i32_0 : i32, i32
  }
  func.func @transform_3(%arg0: i32) -> (i32, i32) {
    %c0_i32 = arith.constant 0 : i32
    %c0_i32_0 = arith.constant 0 : i32
    %c0_i32_1 = arith.constant 0 : i32
    return %c0_i32, %c0_i32_0 : i32, i32
  }
  func.func @transform_4(%arg0: i32) -> (i32, i32) {
    %c0_i32 = arith.constant 0 : i32
    %c0_i32_0 = arith.constant 0 : i32
    %c0_i32_1 = arith.constant 0 : i32
    return %c0_i32, %c0_i32_0 : i32, i32
  }
  func.func @transform_5(%arg0: i32) -> (i32, i32) {
    %c0_i32 = arith.constant 0 : i32
    %c0_i32_0 = arith.constant 0 : i32
    %c0_i32_1 = arith.constant 0 : i32
    return %c0_i32, %c0_i32_0 : i32, i32
  }
  func.func @transform_6(%arg0: i32) -> (i32, i32) {
    %c0_i32 = arith.constant 0 : i32
    %c0_i32_0 = arith.constant 0 : i32
    %c0_i32_1 = arith.constant 0 : i32
    return %c0_i32, %c0_i32_0 : i32, i32
  }
  func.func @transform_7(%arg0: i32) -> (i32, i32) {
    %c0_i32 = arith.constant 0 : i32
    %c0_i32_0 = arith.constant 0 : i32
    return %arg0, %c0_i32 : i32, i32
  }
}

</mosaic_0001>

<llo_original>
// kernel: tpu_custom_call.1
$region0: #{tpu_custom_call.1}
  #allocation0 [shape = 'u32[]', space=smem, size = 0x4, offset = 0x4, fixed_abs, tag = 'smem constant byte address 0x4 - core index']
  #allocation1 [shape = 'u32[72,128]{1,0:T(1,128)}', space=vmem, size = 0x9000, scoped, tag = 'internal scratch']
  %s0 = inlined_call_operand.vmem [shape: f32[16,1], index: 0, kind: input, shape index: {}]
  %s1 = inlined_call_operand.vmem [shape: f32[1,64], index: 1, kind: input, shape index: {}]
  %s2 = inlined_call_operand.vmem [shape: f32[1,64], index: 2, kind: input, shape index: {}]
  %s3 = inlined_call_operand.vmem [shape: f32[64,64], index: 3, kind: input, shape index: {}]
  %s4 = inlined_call_operand.vmem [shape: f32[1,64], index: 4, kind: input, shape index: {}]
  %s5 = inlined_call_operand.vmem [shape: f32[64,2], index: 5, kind: input, shape index: {}]
  %s6 = inlined_call_operand.vmem [shape: f32[1,2], index: 6, kind: input, shape index: {}]
  %s7 = inlined_call_operand.vmem [shape: f32[16,2], index: 7, kind: output, shape index: {}]
  %s8 = sld [smem:[#allocation0]]
  $region38: #{tpu_custom_call.1} parent=0
    _
  %s10 = ssub.s32 1, %s8
  %s11 = scalar_select 0, %s10, %s8
  // Predicated region
  $region2: #{tpu_custom_call.1} parent=0 // pred_check
    _
  $region3: #{tpu_custom_call.1} parent=0 // pred_check_branch
    %13 = sbr.rel (0) target = $region5
  $region4: #{tpu_custom_call.1} parent=0 // pred_region
    _
  $region5: #{tpu_custom_call.1} parent=0 // pred_fallthru
    _
  // Predicated region
  $region6: #{tpu_custom_call.1} parent=0 // pred_check
    _
  $region7: #{tpu_custom_call.1} parent=0 // pred_check_branch
    %15 = sbr.rel (0) target = $region9
  $region8: #{tpu_custom_call.1} parent=0 // pred_region
    _
  $region9: #{tpu_custom_call.1} parent=0 // pred_fallthru
    _
  // Predicated region
  $region10: #{tpu_custom_call.1} parent=0 // pred_check
    _
  $region11: #{tpu_custom_call.1} parent=0 // pred_check_branch
    %17 = sbr.rel (0) target = $region13
  $region12: #{tpu_custom_call.1} parent=0 // pred_region
    _
  $region13: #{tpu_custom_call.1} parent=0 // pred_fallthru
    _
  // Predicated region
  $region14: #{tpu_custom_call.1} parent=0 // pred_check
    _
  $region15: #{tpu_custom_call.1} parent=0 // pred_check_branch
    %19 = sbr.rel (0) target = $region17
  $region16: #{tpu_custom_call.1} parent=0 // pred_region
    _
  $region17: #{tpu_custom_call.1} parent=0 // pred_fallthru
    _
  // Predicated region
  $region18: #{tpu_custom_call.1} parent=0 // pred_check
    _
  $region19: #{tpu_custom_call.1} parent=0 // pred_check_branch
    %21 = sbr.rel (0) target = $region21
  $region20: #{tpu_custom_call.1} parent=0 // pred_region
    _
  $region21: #{tpu_custom_call.1} parent=0 // pred_fallthru
    _
  // Predicated region
  $region22: #{tpu_custom_call.1} parent=0 // pred_check
    _
  $region23: #{tpu_custom_call.1} parent=0 // pred_check_branch
    %23 = sbr.rel (0) target = $region25
  $region24: #{tpu_custom_call.1} parent=0 // pred_region
    _
  $region25: #{tpu_custom_call.1} parent=0 // pred_fallthru
    _
  // Predicated region
  $region26: #{tpu_custom_call.1} parent=0 // pred_check
    _
  $region27: #{tpu_custom_call.1} parent=0 // pred_check_branch
    %25 = sbr.rel (0) target = $region29
  $region28: #{tpu_custom_call.1} parent=0 // pred_region
    _
  $region29: #{tpu_custom_call.1} parent=0 // pred_fallthru
    _
  %v26 = vld [vmem:[%s0] sm:$0xff]
  %v27 = vld [vmem:[%s0 + $0x8] sm:$0xff]
  %v28 = vld [vmem:[%s1] sm:$0x1]
  %30 = vset.pattern.permute.xlu0 0
  %31 = vperm.xlu0 %30, %v26
  %v32 = vpop.permute.xlu0 %31
  %35 = vset.pattern.permute.xlu0 0
  %36 = vperm.xlu0 %35, %v27
  %v37 = vpop.permute.xlu0 %36
  %v40 = vperm.slane %v28, 0
  %v42 = vmul.f32 %v32, %v40
  %v43 = vmul.f32 %v37, %v40
  %v44 = vld [vmem:[%s2] sm:$0x1]
  %v46 = vperm.slane %v44, 0
  %v48 = vadd.f32 %v42, %v46
  %v49 = vadd.f32 %v43, %v46
  %v50 = vtanh.pop %v48
  %v51 = vtanh.pop %v49
  %v52 = vld [vmem:[%s3] sm:$0xff]
  %v53 = vld [vmem:[%s3 + $0x8] sm:$0xff]
  %v54 = vld [vmem:[%s3 + $0x10] sm:$0xff]
  %v55 = vld [vmem:[%s3 + $0x18] sm:$0xff]
  %v56 = vld [vmem:[%s3 + $0x20] sm:$0xff]
  %v57 = vld [vmem:[%s3 + $0x28] sm:$0xff]
  %v58 = vld [vmem:[%s3 + $0x30] sm:$0xff]
  %v59 = vld [vmem:[%s3 + $0x38] sm:$0xff]
  %v60 = vld [vmem:[%s4] sm:$0x1]
  %v62 = vperm.slane %v60, 0
  %vm64 = vcmask 523264
  %v66 = vsel %vm64, %v50, 0
  %v69 = vsel %vm64, %v51, 0
  %71 = vmatpush.msra.mxu0 0.0
  %72 = vmatpush.msra.mxu0 0.0
  %73 = vmatpush.msra.mxu0 0.0
  %74 = vmatpush.msra.mxu0 0.0
  %75 = vmatpush.msra.mxu0 0.0
  %76 = vmatpush.msra.mxu0 0.0
  %77 = vmatpush.msra.mxu0 0.0
  %78 = vmatpush.msra.mxu0 0.0
  %79 = vmatpush.msra.mxu0 %v59
  %80 = vmatpush.msra.mxu0 %v58
  %81 = vmatpush.msra.mxu0 %v57
  %82 = vmatpush.msra.mxu0 %v56
  %83 = vmatpush.msra.mxu0 %v55
  %84 = vmatpush.msra.mxu0 %v54
  %85 = vmatpush.msra.mxu0 %v53
  %86 = vmatpush.msra.mxu0 %v52
  %87 = vmatmul.f32.gmra.mxu0 %v66
  %v88 = vpop.f32.mrf.mxu0
  %v89 = vadd.f32 %v62, %v88
  %90 = vmatmul.f32.gmra.mxu0 %v69
  %v91 = vpop.f32.mrf.mxu0
  %v92 = vadd.f32 %v62, %v91
  %93 = vdwg.mxu0
  %v94 = vtanh.pop %v89
  %v95 = vtanh.pop %v92
  %v96 = vld [vmem:[%s5] sm:$0xff]
  %v97 = vld [vmem:[%s5 + $0x8] sm:$0xff]
  %v98 = vld [vmem:[%s5 + $0x10] sm:$0xff]
  %v99 = vld [vmem:[%s5 + $0x18] sm:$0xff]
  %v100 = vld [vmem:[%s5 + $0x20] sm:$0xff]
  %v101 = vld [vmem:[%s5 + $0x28] sm:$0xff]
  %v102 = vld [vmem:[%s5 + $0x30] sm:$0xff]
  %v103 = vld [vmem:[%s5 + $0x38] sm:$0xff]
  %v104 = vld [vmem:[%s6] sm:$0x1]
  %v106 = vperm.slane %v104, 0
  %v109 = vsel %vm64, %v94, 0
  %v112 = vsel %vm64, %v95, 0
  %114 = vmatpush.msra.mxu0 0.0
  %115 = vmatpush.msra.mxu0 0.0
  %116 = vmatpush.msra.mxu0 0.0
  %117 = vmatpush.msra.mxu0 0.0
  %118 = vmatpush.msra.mxu0 0.0
  %119 = vmatpush.msra.mxu0 0.0
  %120 = vmatpush.msra.mxu0 0.0
  %121 = vmatpush.msra.mxu0 0.0
  %122 = vmatpush.msra.mxu0 %v103
  %123 = vmatpush.msra.mxu0 %v102
  %124 = vmatpush.msra.mxu0 %v101
  %125 = vmatpush.msra.mxu0 %v100
  %126 = vmatpush.msra.mxu0 %v99
  %127 = vmatpush.msra.mxu0 %v98
  %128 = vmatpush.msra.mxu0 %v97
  %129 = vmatpush.msra.mxu0 %v96
  %130 = vmatmul.f32.gmra.mxu0 %v109
  %v131 = vpop.f32.mrf.mxu0
  %v132 = vadd.f32 %v106, %v131
  %133 = vmatmul.f32.gmra.mxu0 %v112
  %v134 = vpop.f32.mrf.mxu0
  %v135 = vadd.f32 %v106, %v134
  %136 = vdwg.mxu0
  %vm137 = vcmask 15360
  %138 = vst.msk [vmem:[%s7] sm:$0xff] %vm137, %v132
  %139 = vst.msk [vmem:[%s7 + $0x8] sm:$0xff] %vm137, %v135
  // Predicated region
  $region30: #{tpu_custom_call.1} parent=0 // pred_check
    _
  $region31: #{tpu_custom_call.1} parent=0 // pred_check_branch
    %141 = sbr.rel (0) target = $region33
  $region32: #{tpu_custom_call.1} parent=0 // pred_region
    _
  $region33: #{tpu_custom_call.1} parent=0 // pred_fallthru
    _
  // Predicated region
  $region34: #{tpu_custom_call.1} parent=0 // pred_check
    _
  $region35: #{tpu_custom_call.1} parent=0 // pred_check_branch
    %143 = sbr.rel (0) target = $region37
  $region36: #{tpu_custom_call.1} parent=0 // pred_region
    _
  $region37: #{tpu_custom_call.1} parent=0 // pred_fallthru
    _

</llo_original>
